<compile_context>
chip_gen: v7x
topology: tpu7x:2x2x1
jax: 0.10.0
libtpu: 0.0.40
codegen_flags: <defaults>
</compile_context>

<pallas_src>
import jax
import jax.numpy as jnp
from jax.experimental import pallas as pl
from jax.experimental.pallas import tpu as pltpu


def _round_up(x, m):
    return ((x + m - 1) // m) * m


def _delta_linear_kernel(x_ref, d_ref, w_ref, b_ref, o_ref, acc_ref):
    """pert = x + delta (VPU); acc += pert @ w (MXU, f32 acc); bias at last k."""
    @pl.when(pl.program_id(2) == 0)
    def _init():
        acc_ref[...] = jnp.zeros_like(acc_ref)

    pert = x_ref[...] + d_ref[...]                       # DeltaWrapper part
    acc_ref[...] += jnp.dot(pert, w_ref[...],            # model(pert) part
                            preferred_element_type=jnp.float32)

    @pl.when(pl.program_id(2) == pl.num_programs(2) - 1)
    def _finalize():
        # Bias broadcast + writeback only once, at the final reduction step.
        o_ref[...] = (acc_ref[...] + b_ref[...]).astype(o_ref.dtype)


def delta_wrapper_forward(x_nchw, delta_nchw, w, b):
    """x_nchw, delta_nchw: [B, C, H, W] f32; w: [C*H*W, K] f32; b: [1, K] f32."""
    B = x_nchw.shape[0]
    C, H, W_sp = x_nchw.shape[1], x_nchw.shape[2], x_nchw.shape[3]
    D = C * H * W_sp
    K = w.shape[1]

    # Glue: flatten NCHW -> [B, D] (row-major, matches torch .view(B, -1)).
    x2 = x_nchw.reshape(B, D)
    d2 = delta_nchw.reshape(B, D)
    b2 = b.reshape(1, K)

    # Tile sizes: comfortably under the 32 MiB scoped-VMEM default on all
    # chips (v7x has only 64 MiB physical VMEM), 128-aligned for the MXU and
    # lane-dense output stores.
    TM = 256 if B >= 256 else _round_up(B, 8)
    TN = 256 if K >= 256 else _round_up(K, 128)
    TK = 512 if D >= 512 else _round_up(D, 128)

    Bp = _round_up(B, TM)
    Kp = _round_up(K, TN)
    Dp = _round_up(D, TK)

    # Zero-pad (glue, plain JAX).  Zero rows/cols contribute nothing to the
    # matmul; padded output rows/cols are sliced away below.
    x2 = jnp.pad(x2, ((0, Bp - B), (0, Dp - D)))
    d2 = jnp.pad(d2, ((0, Bp - B), (0, Dp - D)))
    wp = jnp.pad(w, ((0, Dp - D), (0, Kp - K)))
    bp = jnp.pad(b2, ((0, 0), (0, Kp - K)))

    grid = (Bp // TM, Kp // TN, Dp // TK)

    out_p = pl.pallas_call(
        _delta_linear_kernel,
        out_shape=jax.ShapeDtypeStruct((Bp, Kp), jnp.float32),
        grid_spec=pltpu.PrefetchScalarGridSpec(
            num_scalar_prefetch=0,
            grid=grid,
            in_specs=[
                pl.BlockSpec((TM, TK), lambda i, j, k: (i, k)),   # x
                pl.BlockSpec((TM, TK), lambda i, j, k: (i, k)),   # delta
                pl.BlockSpec((TK, TN), lambda i, j, k: (k, j)),   # w
                pl.BlockSpec((1, TN), lambda i, j, k: (0, j)),    # bias
            ],
            out_specs=pl.BlockSpec((TM, TN), lambda i, j, k: (i, j)),
            scratch_shapes=[pltpu.VMEM((TM, TN), jnp.float32)],
        ),
        compiler_params=pltpu.CompilerParams(
            dimension_semantics=("parallel", "parallel", "arbitrary"),
            vmem_limit_bytes=32 * 1024 * 1024,
        ),
    )(x2, d2, wp, bp)

    return out_p[:B, :K]


def reference_forward(x_nchw, delta_nchw, w, b):
    pert = x_nchw + delta_nchw
    B = pert.shape[0]
    return pert.reshape(B, -1) @ w + b


if __name__ == "__main__":
    # Small deterministic shapes: batch=2, channels=4, spatial=16x16, classes=10
    B, C, H, W = 2, 4, 16, 16
    K = 10
    D = C * H * W

    key = jax.random.PRNGKey(0)
    kx, kd, kw, kb = jax.random.split(key, 4)

    x = jax.random.normal(kx, (B, C, H, W), dtype=jnp.float32)
    delta = 0.1 * jax.random.normal(kd, (B, C, H, W), dtype=jnp.float32)

    # Deterministic synthetic "model" parameters (linear classifier)
    w = 0.02 * jax.random.normal(kw, (D, K), dtype=jnp.float32)
    b = 0.01 * jax.random.normal(kb, (1, K), dtype=jnp.float32)

    out = delta_wrapper_forward(x, delta, w, b)
    out = jax.block_until_ready(out)

    ref = reference_forward(x, delta, w, b)
    assert out.shape == (B, K)
    assert jnp.allclose(out, ref, atol=1e-4, rtol=1e-4)

    print("KERNEL_OK")
</pallas_src>

<mosaic_0001>
module attributes {stable_mosaic.version = 11 : i64} {
  func.func @_delta_linear_kernel(%arg0: i32, %arg1: i32, %arg2: i32, %arg3: memref<8x512xf32, #tpu.memory_space<vmem>>, %arg4: memref<8x512xf32, #tpu.memory_space<vmem>>, %arg5: memref<512x128xf32, #tpu.memory_space<vmem>>, %arg6: memref<1x128xf32, #tpu.memory_space<vmem>>, %arg7: memref<8x128xf32, #tpu.memory_space<vmem>>, %arg8: memref<8x128xf32, #tpu.memory_space<vmem>>) attributes {dimension_semantics = [#tpu.dimension_semantics<parallel>, #tpu.dimension_semantics<parallel>, #tpu.dimension_semantics<arbitrary>], iteration_bounds = array<i64: 1, 1, 2>, scalar_prefetch = 0 : i64, scratch_operands = 1 : i64, tpu.core_type = #tpu.core_type<tc>, window_params = [{transform_indices = @transform_0, window_bounds = array<i64: 8, 512>}, {transform_indices = @transform_1, window_bounds = array<i64: 8, 512>}, {transform_indices = @transform_2, window_bounds = array<i64: 512, 128>}, {transform_indices = @transform_3, window_bounds = array<i64: 1, 128>}, {transform_indices = @transform_4, window_bounds = array<i64: 8, 128>}]} {
    %c0_i32 = arith.constant 0 : i32
    %0 = arith.cmpi eq, %arg2, %c0_i32 : i32
    %1 = arith.extui %0 : i1 to i32
    %c0_i32_0 = arith.constant 0 : i32
    %2 = arith.cmpi ne, %1, %c0_i32_0 : i32
    scf.if %2 {
      %cst_11 = arith.constant 0.000000e+00 : f32
      %14 = vector.broadcast %cst_11 : f32 to vector<8x128xf32>
      %c0_12 = arith.constant 0 : index
      %c0_13 = arith.constant 0 : index
      %15 = vector.load %arg8[%c0_12, %c0_13] : memref<8x128xf32, #tpu.memory_space<vmem>>, vector<8x128xf32>
      tpu.vector_store %arg8[%c0_12, %c0_13], %14 {strides = array<i32>} : memref<8x128xf32, #tpu.memory_space<vmem>>, vector<8x128xf32>,
    } else {
    }
    %c0 = arith.constant 0 : index
    %c0_1 = arith.constant 0 : index
    %3 = vector.load %arg3[%c0, %c0_1] : memref<8x512xf32, #tpu.memory_space<vmem>>, vector<8x512xf32>
    %c0_2 = arith.constant 0 : index
    %c0_3 = arith.constant 0 : index
    %4 = vector.load %arg4[%c0_2, %c0_3] : memref<8x512xf32, #tpu.memory_space<vmem>>, vector<8x512xf32>
    %5 = arith.addf %3, %4 : vector<8x512xf32>
    %c0_4 = arith.constant 0 : index
    %c0_5 = arith.constant 0 : index
    %6 = vector.load %arg8[%c0_4, %c0_5] : memref<8x128xf32, #tpu.memory_space<vmem>>, vector<8x128xf32>
    %c0_6 = arith.constant 0 : index
    %c0_7 = arith.constant 0 : index
    %7 = vector.load %arg5[%c0_6, %c0_7] : memref<512x128xf32, #tpu.memory_space<vmem>>, vector<512x128xf32>
    %cst = arith.constant dense<0.000000e+00> : vector<8x128xf32>
    %8 = tpu.matmul %5, %7, %cst {dimension_numbers = #tpu.dot_dimension_numbers<[1], [0], [0], [1], [0, 0, 1, 1], [], []>} : vector<8x512xf32>, vector<512x128xf32>, vector<8x128xf32> -> vector<8x128xf32>
    %9 = arith.addf %6, %8 : vector<8x128xf32>
    %c0_8 = arith.constant 0 : index
    %c0_9 = arith.constant 0 : index
    %10 = vector.load %arg8[%c0_8, %c0_9] : memref<8x128xf32, #tpu.memory_space<vmem>>, vector<8x128xf32>
    tpu.vector_store %arg8[%c0_8, %c0_9], %9 {strides = array<i32>} : memref<8x128xf32, #tpu.memory_space<vmem>>, vector<8x128xf32>,
    %c1_i32 = arith.constant 1 : i32
    %11 = arith.cmpi eq, %arg2, %c1_i32 : i32
    %12 = arith.extui %11 : i1 to i32
    %c0_i32_10 = arith.constant 0 : i32
    %13 = arith.cmpi ne, %12, %c0_i32_10 : i32
    scf.if %13 {
      %c0_11 = arith.constant 0 : index
      %c0_12 = arith.constant 0 : index
      %14 = vector.load %arg8[%c0_11, %c0_12] : memref<8x128xf32, #tpu.memory_space<vmem>>, vector<8x128xf32>
      %c0_13 = arith.constant 0 : index
      %c0_14 = arith.constant 0 : index
      %15 = vector.load %arg6[%c0_13, %c0_14] : memref<1x128xf32, #tpu.memory_space<vmem>>, vector<1x128xf32>
      %16 = vector.broadcast %15 : vector<1x128xf32> to vector<8x128xf32>
      %17 = arith.addf %14, %16 : vector<8x128xf32>
      %c0_15 = arith.constant 0 : index
      %c0_16 = arith.constant 0 : index
      %18 = vector.load %arg7[%c0_15, %c0_16] : memref<8x128xf32, #tpu.memory_space<vmem>>, vector<8x128xf32>
      tpu.vector_store %arg7[%c0_15, %c0_16], %17 {strides = array<i32>} : memref<8x128xf32, #tpu.memory_space<vmem>>, vector<8x128xf32>,
    } else {
    }
    return
  }
  func.func @transform_0(%arg0: i32, %arg1: i32, %arg2: i32) -> (i32, i32) {
    %c0_i32 = arith.constant 0 : i32
    return %arg0, %arg2 : i32, i32
  }
  func.func @transform_1(%arg0: i32, %arg1: i32, %arg2: i32) -> (i32, i32) {
    %c0_i32 = arith.constant 0 : i32
    return %arg0, %arg2 : i32, i32
  }
  func.func @transform_2(%arg0: i32, %arg1: i32, %arg2: i32) -> (i32, i32) {
    %c0_i32 = arith.constant 0 : i32
    return %arg2, %arg1 : i32, i32
  }
  func.func @transform_3(%arg0: i32, %arg1: i32, %arg2: i32) -> (i32, i32) {
    %c0_i32 = arith.constant 0 : i32
    %c0_i32_0 = arith.constant 0 : i32
    return %c0_i32, %arg1 : i32, i32
  }
  func.func @transform_4(%arg0: i32, %arg1: i32, %arg2: i32) -> (i32, i32) {
    %c0_i32 = arith.constant 0 : i32
    return %arg0, %arg1 : i32, i32
  }
}

</mosaic_0001>

<llo_original>
// kernel: tpu_custom_call.1
$region0: #{tpu_custom_call.1}
  #allocation0 [shape = 'u32[]', space=smem, size = 0x4, offset = 0x4, fixed_abs, tag = 'smem constant byte address 0x4 - core index']
  #allocation1 [shape = 'u32[144,128]{1,0:T(1,128)}', space=vmem, size = 0x12000, scoped, tag = 'internal scratch']
  #allocation2 [shape = 'f32[8,128]{1,0:T(8,128)}', space=vmem, size = 0x1000, scoped, tag = 'scratch operand']
  %s0 = inlined_call_operand.hbm [shape: f32[8,1024], index: 0, kind: input, shape index: {}]
  %s1 = inlined_call_operand.hbm [shape: f32[8,1024], index: 1, kind: input, shape index: {}]
  %s2 = inlined_call_operand.hbm [shape: f32[1024,128], index: 2, kind: input, shape index: {}]
  %s3 = inlined_call_operand.vmem [shape: f32[1,128], index: 3, kind: input, shape index: {}]
  %s4 = inlined_call_operand.hbm [shape: f32[8,128], index: 4, kind: output, shape index: {}]
  %s5 = sld [smem:[#allocation0]]
  $region69: #{tpu_custom_call.1} parent=0
    _
  %s7 = ssub.s32 1, %s5
  %s8 = scalar_select 0, %s7, %s5
  $region1: #{tpu_custom_call.1} parent=0
    #allocation3 [shape = 'u8[32768]{0}', space=vmem, size = 0x8000, scoped, tag = 'input window, operand 0']
    #allocation4 [shape = 's32[2]{0}', space=sflag, size = 0x8, scoped, tag = 'scoped memory for tpu_custom_call.1']
    #allocation5 [shape = 's32[2]{0}', space=sflag, size = 0x8, scoped, tag = 'scoped memory for tpu_custom_call.1']
    #allocation6 [shape = 'u8[32768]{0}', space=vmem, size = 0x8000, scoped, tag = 'input window, operand 1']
    #allocation7 [shape = 's32[2]{0}', space=sflag, size = 0x8, scoped, tag = 'scoped memory for tpu_custom_call.1']
    #allocation8 [shape = 'u8[524288]{0}', space=vmem, size = 0x80000, scoped, tag = 'input window, operand 2']
    #allocation9 [shape = 'u8[4096]{0}', space=vmem, size = 0x1000, scoped, tag = 'output window, operand 0, single buffered']
    %9 = vsyncpa [#allocation4], 0
    %s10 = scalar_lea.sflag [#allocation4], 1
    %11 = vsyncpa %s10, 0
    %12 = vsyncpa [#allocation7], 0
    %s13 = scalar_lea.sflag [#allocation7], 1
    %14 = vsyncpa %s13, 0
    %15 = vsyncpa [#allocation5], 0
    loop: start=0, step=1, limit=4
    $region2: #{tpu_custom_call.1} parent=1 // loop_pre_header
      _
    $region3: #{tpu_custom_call.1} parent=1 // loop_header
      %s17 = sphi 0, %s21
      %p18 = scmp.ge.s32.totalorder %s17, 4
      %s24 = sphi 0, %s43
      %s25 = sphi 0, %s39
      %s26 = sphi 0, %s35
      %s27 = sphi 0, %s24
      %s28 = sphi 0, %s25
      %s29 = sphi 0, %s26
      %s30 = sphi 0, %s27
      %s31 = sphi 0, %s28
      %s32 = sphi 0, %s29
      %s48 = sphi 0, %s50
      %s51 = sphi 0, %s48
      %s52 = sphi 0, %s51
      %s68 = sphi 0, %s52
      %s76 = sphi 0, %s78
      %s79 = sphi 0, %s76
      %s80 = sphi 0, %s79
      %s96 = sphi 0, %s80
      %s104 = sphi 0, %s106
      %s107 = sphi 0, %s104
      %s108 = sphi 0, %s107
      %s124 = sphi 0, %s108
      %s130 = sphi 0, %s132
      %s133 = sphi 0, %s130
      %s134 = sphi 0, %s133
      %s150 = sphi 0, %s134
      %s158 = sphi 0, %s160
      %s161 = sphi 0, %s158
      %s162 = sphi 0, %s161
      %s178 = sphi 0, %s162
    $region4: #{tpu_custom_call.1} parent=1 // loop_header_branch
      %20 = sbr.rel (%p18) target = $region8
    $region5: #{tpu_custom_call.1} parent=1 // loop_body
      %s22 = ssub.s32 %s17, 1
      %s23 = ssub.s32 %s17, 2
      %s33 = sadd.s32 1, %s26
      %p34 = scmp.ge.s32.totalorder %s33, 2
      %s35 = scalar_select %p34, 0, %s33
      %s36 = sadd.s32 1, %s25
      %s37 = scalar_select %p34, %s36, %s25
      %p38 = scmp.ge.s32.totalorder %s37, 1
      %s39 = scalar_select %p38, 0, %s37
      %s40 = sadd.s32 1, %s24
      %s41 = scalar_select %p38, %s40, %s24
      %p42 = scmp.ge.s32.totalorder %s41, 1
      %s43 = scalar_select %p42, 0, %s41
      %s44 = ssub.s32 %s24, %s43
      %s45 = ssub.s32 %s26, %s35
      %s46 = sor.u32 %s44, %s45
      %p47 = scmp.eq.s32.totalorder %s46, 0
      %s49 = sadd.s32 %s48, 1
      %s50 = scalar_select %p47, %s48, %s49
      %p53 = pneg %p47
      %p54 = scmp.eq.s32.totalorder %s17, 1
      %p55 = por %p53, %p54
      %p56 = scmp.ne.s32.totalorder %s48, %s51
      %p57 = scmp.eq.s32.totalorder %s17, 0
      %p58 = por %p56, %p57
      %p59 = scmp.ne.s32.totalorder %s48, %s51
      %p60 = scmp.eq.s32.totalorder %s22, 1
      %p61 = por %p59, %p60
      %p62 = scmp.ne.s32.totalorder %s51, %s52
      %p63 = scmp.eq.s32.totalorder %s22, 0
      %p64 = por %p62, %p63
      %p65 = scmp.ne.s32.totalorder %s51, %s52
      %p66 = scmp.eq.s32.totalorder %s23, 1
      %p67 = por %p65, %p66
      %p69 = scmp.ne.s32.totalorder %s52, %s68
      %p70 = scmp.eq.s32.totalorder %s23, 0
      %p71 = por %p69, %p70
      %s72 = ssub.s32 %s24, %s43
      %s73 = ssub.s32 %s26, %s35
      %s74 = sor.u32 %s72, %s73
      %p75 = scmp.eq.s32.totalorder %s74, 0
      %s77 = sadd.s32 %s76, 1
      %s78 = scalar_select %p75, %s76, %s77
      %p81 = pneg %p75
      %p82 = scmp.eq.s32.totalorder %s17, 1
      %p83 = por %p81, %p82
      %p84 = scmp.ne.s32.totalorder %s76, %s79
      %p85 = scmp.eq.s32.totalorder %s17, 0
      %p86 = por %p84, %p85
      %p87 = scmp.ne.s32.totalorder %s76, %s79
      %p88 = scmp.eq.s32.totalorder %s22, 1
      %p89 = por %p87, %p88
      %p90 = scmp.ne.s32.totalorder %s79, %s80
      %p91 = scmp.eq.s32.totalorder %s22, 0
      %p92 = por %p90, %p91
      %p93 = scmp.ne.s32.totalorder %s79, %s80
      %p94 = scmp.eq.s32.totalorder %s23, 1
      %p95 = por %p93, %p94
      %p97 = scmp.ne.s32.totalorder %s80, %s96
      %p98 = scmp.eq.s32.totalorder %s23, 0
      %p99 = por %p97, %p98
      %s100 = ssub.s32 %s26, %s35
      %s101 = ssub.s32 %s25, %s39
      %s102 = sor.u32 %s100, %s101
      %p103 = scmp.eq.s32.totalorder %s102, 0
      %s105 = sadd.s32 %s104, 1
      %s106 = scalar_select %p103, %s104, %s105
      %p109 = pneg %p103
      %p110 = scmp.eq.s32.totalorder %s17, 1
      %p111 = por %p109, %p110
      %p112 = scmp.ne.s32.totalorder %s104, %s107
      %p113 = scmp.eq.s32.totalorder %s17, 0
      %p114 = por %p112, %p113
      %p115 = scmp.ne.s32.totalorder %s104, %s107
      %p116 = scmp.eq.s32.totalorder %s22, 1
      %p117 = por %p115, %p116
      %p118 = scmp.ne.s32.totalorder %s107, %s108
      %p119 = scmp.eq.s32.totalorder %s22, 0
      %p120 = por %p118, %p119
      %p121 = scmp.ne.s32.totalorder %s107, %s108
      %p122 = scmp.eq.s32.totalorder %s23, 1
      %p123 = por %p121, %p122
      %p125 = scmp.ne.s32.totalorder %s108, %s124
      %p126 = scmp.eq.s32.totalorder %s23, 0
      %p127 = por %p125, %p126
      %s128 = ssub.s32 %s25, %s39
      %p129 = scmp.eq.s32.totalorder %s128, 0
      %s131 = sadd.s32 %s130, 1
      %s132 = scalar_select %p129, %s130, %s131
      %p135 = pneg %p129
      %p136 = scmp.eq.s32.totalorder %s17, 1
      %p137 = por %p135, %p136
      %p138 = scmp.ne.s32.totalorder %s130, %s133
      %p139 = scmp.eq.s32.totalorder %s17, 0
      %p140 = por %p138, %p139
      %p141 = scmp.ne.s32.totalorder %s130, %s133
      %p142 = scmp.eq.s32.totalorder %s22, 1
      %p143 = por %p141, %p142
      %p144 = scmp.ne.s32.totalorder %s133, %s134
      %p145 = scmp.eq.s32.totalorder %s22, 0
      %p146 = por %p144, %p145
      %p147 = scmp.ne.s32.totalorder %s133, %s134
      %p148 = scmp.eq.s32.totalorder %s23, 1
      %p149 = por %p147, %p148
      %p151 = scmp.ne.s32.totalorder %s134, %s150
      %p152 = scmp.eq.s32.totalorder %s23, 0
      %p153 = por %p151, %p152
      %s154 = ssub.s32 %s24, %s43
      %s155 = ssub.s32 %s25, %s39
      %s156 = sor.u32 %s154, %s155
      %p157 = scmp.eq.s32.totalorder %s156, 0
      %s159 = sadd.s32 %s158, 1
      %s160 = scalar_select %p157, %s158, %s159
      %p163 = pneg %p157
      %p164 = scmp.eq.s32.totalorder %s17, 1
      %p165 = por %p163, %p164
      %p166 = scmp.ne.s32.totalorder %s158, %s161
      %p167 = scmp.eq.s32.totalorder %s17, 0
      %p168 = por %p166, %p167
      %p169 = scmp.ne.s32.totalorder %s158, %s161
      %p170 = scmp.eq.s32.totalorder %s22, 1
      %p171 = por %p169, %p170
      %p172 = scmp.ne.s32.totalorder %s161, %s162
      %p173 = scmp.eq.s32.totalorder %s22, 0
      %p174 = por %p172, %p173
      %p175 = scmp.ne.s32.totalorder %s161, %s162
      %p176 = scmp.eq.s32.totalorder %s23, 1
      %p177 = por %p175, %p176
      %p179 = scmp.ne.s32.totalorder %s162, %s178
      %p180 = scmp.eq.s32.totalorder %s23, 0
      %p181 = por %p179, %p180
      %p182 = scmp.le.s32.totalorder 1, %s17
      %p183 = scmp.lt.s32.totalorder %s17, 3
      %p184 = pnand %p182, %p183
      %p185 = pneg %p184
      // Predicated region
      $region9: #{tpu_custom_call.1} parent=5 // pred_check
        _
      $region10: #{tpu_custom_call.1} parent=5 // pred_check_branch
        %187 = sbr.rel (%p184) target = $region12
      $region11: #{tpu_custom_call.1} parent=5 // pred_region
        %s188 = ssub.s32 %s17, 1
        // Predicated region
        $region13: #{tpu_custom_call.1} parent=11 // pred_check
          %p189 = pneg %p146
        $region14: #{tpu_custom_call.1} parent=11 // pred_check_branch
          %191 = sbr.rel (%p189) target = $region16
        $region15: #{tpu_custom_call.1} parent=11 // pred_region
          %p192 = scmp.lt.s32.totalorder %s28, 0
          %s193 = scalar_select %p192, %s28, 0
          %s194 = scalar_lea.vmem %s3, %s193
        $region16: #{tpu_custom_call.1} parent=11 // pred_fallthru
          _
      $region12: #{tpu_custom_call.1} parent=5 // pred_fallthru
        _
      %p195 = scmp.lt.s32.totalorder %s17, 2
      // Predicated region
      $region17: #{tpu_custom_call.1} parent=5 // pred_check
        %p196 = pneg %p195
      $region18: #{tpu_custom_call.1} parent=5 // pred_check_branch
        %198 = sbr.rel (%p196) target = $region20
      $region19: #{tpu_custom_call.1} parent=5 // pred_region
        // Predicated region
        $region21: #{tpu_custom_call.1} parent=19 // pred_check
          %p199 = pneg %p58
        $region22: #{tpu_custom_call.1} parent=19 // pred_check_branch
          %201 = sbr.rel (%p199) target = $region24
        $region23: #{tpu_custom_call.1} parent=19 // pred_region
          %s202 = sand.u32 %s48, 1
          %s203 = scalar_lea.sflag [#allocation4], %s202
          %s204 = sand.u32 %s48, 1
          %s205 = smul.addr %s204, 32
          %s206 = scalar_lea.vmem [#allocation3], %s205
          %s207 = smul.u32 4, %s26
          %s209 = ssub.s32 512, 512
          %210 = vsyncadd %s203, %s209
          %s211 = smul.addr %s24, 8
          %s212 = sadd.s32 %s207, %s211
          %s213 = smul.addr %s212, 128
          %s214 = scalar_lea.hbm %s0, %s213
          %s216 = sshll.u32 %s206, 4
          %s217 = int_to_ptr.vmem [resolvable:$true] %s216
          %219 = dma.hbm_to_vmem [thread:$0]  %s214, 512, %s217, %s203
        $region24: #{tpu_custom_call.1} parent=19 // pred_fallthru
          _
        // Predicated region
        $region25: #{tpu_custom_call.1} parent=19 // pred_check
          %p220 = pneg %p86
        $region26: #{tpu_custom_call.1} parent=19 // pred_check_branch
          %222 = sbr.rel (%p220) target = $region28
        $region27: #{tpu_custom_call.1} parent=19 // pred_region
          %s223 = sand.u32 %s17, 1
          %s224 = scalar_lea.sflag [#allocation7], %s223
          %s225 = sand.u32 %s76, 1
          %s226 = smul.addr %s225, 32
          %s227 = scalar_lea.vmem [#allocation6], %s226
          %s228 = smul.u32 4, %s26
          %s230 = ssub.s32 512, 512
          %231 = vsyncadd %s224, %s230
          %s232 = smul.addr %s24, 8
          %s233 = sadd.s32 %s228, %s232
          %s234 = smul.addr %s233, 128
          %s235 = scalar_lea.hbm %s1, %s234
          %s237 = sshll.u32 %s227, 4
          %s238 = int_to_ptr.vmem [resolvable:$true] %s237
          %240 = dma.hbm_to_vmem [thread:$0]  %s235, 512, %s238, %s224
        $region28: #{tpu_custom_call.1} parent=19 // pred_fallthru
          _
        // Predicated region
        $region29: #{tpu_custom_call.1} parent=19 // pred_check
          %p241 = pneg %p114
        $region30: #{tpu_custom_call.1} parent=19 // pred_check_branch
          %243 = sbr.rel (%p241) target = $region32
        $region31: #{tpu_custom_call.1} parent=19 // pred_region
          %s244 = sand.u32 %s17, 1
          %s245 = scalar_lea.sflag [#allocation7], %s244
          %s246 = sand.u32 %s104, 1
          %s247 = smul.addr %s246, 512
          %s248 = scalar_lea.vmem [#allocation8], %s247
          %s249 = smul.u32 64, %s26
          %s251 = ssub.s32 8192, 8192
          %252 = vsyncadd %s245, %s251
          %s253 = sadd.s32 %s25, %s249
          %s254 = smul.addr %s253, 128
          %s255 = scalar_lea.hbm %s2, %s254
          %s256 = sshll.u32 %s248, 4
          %s257 = int_to_ptr.vmem [resolvable:$true] %s256
          %262 = dma.hbm_to_vmem [thread:$0]  %s255, 8192, %s257, %s245, 128, 128, 8
        $region32: #{tpu_custom_call.1} parent=19 // pred_fallthru
          _
      $region20: #{tpu_custom_call.1} parent=5 // pred_fallthru
        _
      %p263 = scmp.le.s32.totalorder 1, %s17
      %p264 = scmp.lt.s32.totalorder %s17, 3
      %p265 = pnand %p263, %p264
      %p266 = pneg %p265
      // Predicated region
      $region33: #{tpu_custom_call.1} parent=5 // pred_check
        _
      $region34: #{tpu_custom_call.1} parent=5 // pred_check_branch
        %268 = sbr.rel (%p265) target = $region36
      $region35: #{tpu_custom_call.1} parent=5 // pred_region
        %s269 = ssub.s32 %s17, 1
        %s270 = sand.u32 %s51, 1
        %s271 = scalar_lea.sflag [#allocation4], %s270
        %s272 = sand.u32 %s51, 1
        %s273 = smul.addr %s272, 32
        %s274 = scalar_lea.vmem [#allocation3], %s273
        // Predicated region
        $region37: #{tpu_custom_call.1} parent=35 // pred_check
          %p275 = pneg %p64
        $region38: #{tpu_custom_call.1} parent=35 // pred_check_branch
          %277 = sbr.rel (%p275) target = $region40
        $region39: #{tpu_custom_call.1} parent=35 // pred_region
          %278 = dma.done %s271, 512
        $region40: #{tpu_custom_call.1} parent=35 // pred_fallthru
          _
        %s279 = sand.u32 %s22, 1
        %s280 = scalar_lea.sflag [#allocation7], %s279
        %s281 = sand.u32 %s79, 1
        %s282 = smul.addr %s281, 32
        %s283 = scalar_lea.vmem [#allocation6], %s282
        // Predicated region
        $region41: #{tpu_custom_call.1} parent=35 // pred_check
          %p284 = pneg %p92
        $region42: #{tpu_custom_call.1} parent=35 // pred_check_branch
          %286 = sbr.rel (%p284) target = $region44
        $region43: #{tpu_custom_call.1} parent=35 // pred_region
          %287 = dma.done %s280, 512
        $region44: #{tpu_custom_call.1} parent=35 // pred_fallthru
          _
        %s288 = sand.u32 %s22, 1
        %s289 = scalar_lea.sflag [#allocation7], %s288
        %s290 = sand.u32 %s107, 1
        %s291 = smul.addr %s290, 512
        %s292 = scalar_lea.vmem [#allocation8], %s291
        // Predicated region
        $region45: #{tpu_custom_call.1} parent=35 // pred_check
          %p293 = pneg %p120
        $region46: #{tpu_custom_call.1} parent=35 // pred_check_branch
          %295 = sbr.rel (%p293) target = $region48
        $region47: #{tpu_custom_call.1} parent=35 // pred_region
          %296 = dma.done %s289, 8192
        $region48: #{tpu_custom_call.1} parent=35 // pred_fallthru
          _
        %s297 = sand.u32 %s51, 1
        %s298 = scalar_lea.sflag [#allocation4], %s297
        %s299 = sand.u32 %s51, 1
        %s300 = smul.addr %s299, 32
        %s301 = scalar_lea.vmem [#allocation3], %s300
        %p302 = pneg %p64
        %p303 = pneg %p61
        %s304 = sand.u32 %s22, 1
        %s305 = scalar_lea.sflag [#allocation7], %s304
        %s306 = sand.u32 %s79, 1
        %s307 = smul.addr %s306, 32
        %s308 = scalar_lea.vmem [#allocation6], %s307
        %p309 = pneg %p92
        %p310 = pneg %p89
        %s311 = sand.u32 %s22, 1
        %s312 = scalar_lea.sflag [#allocation7], %s311
        %s313 = sand.u32 %s107, 1
        %s314 = smul.addr %s313, 512
        %s315 = scalar_lea.vmem [#allocation8], %s314
        %p316 = pneg %p120
        %p317 = pneg %p117
        %p318 = scmp.lt.s32.totalorder %s28, 0
        %s319 = scalar_select %p318, %s28, 0
        %s320 = scalar_lea.vmem %s3, %s319
        %p321 = pneg %p146
        %p322 = pneg %p143
        %p323 = pneg %p174
        %p324 = pneg %p171
        %s325 = smul.u32 4, %s29
        %s326 = smul.u32 4, %s29
        %s327 = smul.u32 64, %s29
        %p328 = scmp.lt.s32.totalorder %s28, 0
        %s329 = scalar_select %p328, %s28, 0
        %s330 = scalar_lea.vmem %s3, %s329
        %p331 = scmp.eq.s32.totalorder %s29, 0
        // Predicated region
        $region49: #{tpu_custom_call.1} parent=35 // pred_check
          %p332 = pneg %p331
        $region50: #{tpu_custom_call.1} parent=35 // pred_check_branch
          %334 = sbr.rel (%p332) target = $region52
        $region51: #{tpu_custom_call.1} parent=35 // pred_region
          %335 = vst [vmem:[#allocation2] sm:$0xff] 0.0
        $region52: #{tpu_custom_call.1} parent=35 // pred_fallthru
          _
        %v336 = vld [vmem:[%s274] sm:$0xff]
        %v337 = vld [vmem:[%s274 + $0x8] sm:$0xff]
        %v338 = vld [vmem:[%s274 + $0x10] sm:$0xff]
        %v339 = vld [vmem:[%s274 + $0x18] sm:$0xff]
        %v340 = vld [vmem:[%s283] sm:$0xff]
        %v341 = vld [vmem:[%s283 + $0x8] sm:$0xff]
        %v342 = vld [vmem:[%s283 + $0x10] sm:$0xff]
        %v343 = vld [vmem:[%s283 + $0x18] sm:$0xff]
        %v344 = vadd.f32 %v336, %v340
        %v345 = vadd.f32 %v337, %v341
        %v346 = vadd.f32 %v338, %v342
        %v347 = vadd.f32 %v339, %v343
        %v348 = vld [vmem:[#allocation2] sm:$0xff]
        %v349 = vld [vmem:[%s292] sm:$0xff]
        %v350 = vld [vmem:[%s292 + $0x8] sm:$0xff]
        %v351 = vld [vmem:[%s292 + $0x10] sm:$0xff]
        %v352 = vld [vmem:[%s292 + $0x18] sm:$0xff]
        %v353 = vld [vmem:[%s292 + $0x20] sm:$0xff]
        %v354 = vld [vmem:[%s292 + $0x28] sm:$0xff]
        %v355 = vld [vmem:[%s292 + $0x30] sm:$0xff]
        %v356 = vld [vmem:[%s292 + $0x38] sm:$0xff]
        %v357 = vld [vmem:[%s292 + $0x40] sm:$0xff]
        %v358 = vld [vmem:[%s292 + $0x48] sm:$0xff]
        %v359 = vld [vmem:[%s292 + $0x50] sm:$0xff]
        %v360 = vld [vmem:[%s292 + $0x58] sm:$0xff]
        %v361 = vld [vmem:[%s292 + $0x60] sm:$0xff]
        %v362 = vld [vmem:[%s292 + $0x68] sm:$0xff]
        %v363 = vld [vmem:[%s292 + $0x70] sm:$0xff]
        %v364 = vld [vmem:[%s292 + $0x78] sm:$0xff]
        %v365 = vld [vmem:[%s292 + $0x80] sm:$0xff]
        %v366 = vld [vmem:[%s292 + $0x88] sm:$0xff]
        %v367 = vld [vmem:[%s292 + $0x90] sm:$0xff]
        %v368 = vld [vmem:[%s292 + $0x98] sm:$0xff]
        %v369 = vld [vmem:[%s292 + $0xa0] sm:$0xff]
        %v370 = vld [vmem:[%s292 + $0xa8] sm:$0xff]
        %v371 = vld [vmem:[%s292 + $0xb0] sm:$0xff]
        %v372 = vld [vmem:[%s292 + $0xb8] sm:$0xff]
        %v373 = vld [vmem:[%s292 + $0xc0] sm:$0xff]
        %v374 = vld [vmem:[%s292 + $0xc8] sm:$0xff]
        %v375 = vld [vmem:[%s292 + $0xd0] sm:$0xff]
        %v376 = vld [vmem:[%s292 + $0xd8] sm:$0xff]
        %v377 = vld [vmem:[%s292 + $0xe0] sm:$0xff]
        %v378 = vld [vmem:[%s292 + $0xe8] sm:$0xff]
        %v379 = vld [vmem:[%s292 + $0xf0] sm:$0xff]
        %v380 = vld [vmem:[%s292 + $0xf8] sm:$0xff]
        %v381 = vld [vmem:[%s292 + $0x100] sm:$0xff]
        %v382 = vld [vmem:[%s292 + $0x108] sm:$0xff]
        %v383 = vld [vmem:[%s292 + $0x110] sm:$0xff]
        %v384 = vld [vmem:[%s292 + $0x118] sm:$0xff]
        %v385 = vld [vmem:[%s292 + $0x120] sm:$0xff]
        %v386 = vld [vmem:[%s292 + $0x128] sm:$0xff]
        %v387 = vld [vmem:[%s292 + $0x130] sm:$0xff]
        %v388 = vld [vmem:[%s292 + $0x138] sm:$0xff]
        %v389 = vld [vmem:[%s292 + $0x140] sm:$0xff]
        %v390 = vld [vmem:[%s292 + $0x148] sm:$0xff]
        %v391 = vld [vmem:[%s292 + $0x150] sm:$0xff]
        %v392 = vld [vmem:[%s292 + $0x158] sm:$0xff]
        %v393 = vld [vmem:[%s292 + $0x160] sm:$0xff]
        %v394 = vld [vmem:[%s292 + $0x168] sm:$0xff]
        %v395 = vld [vmem:[%s292 + $0x170] sm:$0xff]
        %v396 = vld [vmem:[%s292 + $0x178] sm:$0xff]
        %v397 = vld [vmem:[%s292 + $0x180] sm:$0xff]
        %v398 = vld [vmem:[%s292 + $0x188] sm:$0xff]
        %v399 = vld [vmem:[%s292 + $0x190] sm:$0xff]
        %v400 = vld [vmem:[%s292 + $0x198] sm:$0xff]
        %v401 = vld [vmem:[%s292 + $0x1a0] sm:$0xff]
        %v402 = vld [vmem:[%s292 + $0x1a8] sm:$0xff]
        %v403 = vld [vmem:[%s292 + $0x1b0] sm:$0xff]
        %v404 = vld [vmem:[%s292 + $0x1b8] sm:$0xff]
        %v405 = vld [vmem:[%s292 + $0x1c0] sm:$0xff]
        %v406 = vld [vmem:[%s292 + $0x1c8] sm:$0xff]
        %v407 = vld [vmem:[%s292 + $0x1d0] sm:$0xff]
        %v408 = vld [vmem:[%s292 + $0x1d8] sm:$0xff]
        %v409 = vld [vmem:[%s292 + $0x1e0] sm:$0xff]
        %v410 = vld [vmem:[%s292 + $0x1e8] sm:$0xff]
        %v411 = vld [vmem:[%s292 + $0x1f0] sm:$0xff]
        %v412 = vld [vmem:[%s292 + $0x1f8] sm:$0xff]
        %413 = vmatprep.subr.mxu0 0.0
        %414 = vmatpush1.msra.mxu0 %v349
        %415 = vmatprep.subr.mxu0 0.0
        %416 = vmatpush1.msra.mxu0 %v350
        %417 = vmatprep.subr.mxu0 0.0
        %418 = vmatpush1.msra.mxu0 %v351
        %419 = vmatprep.subr.mxu0 0.0
        %420 = vmatpush1.msra.mxu0 %v352
        %421 = vmatprep.subr.mxu0 0.0
        %422 = vmatpush1.msra.mxu0 %v353
        %423 = vmatprep.subr.mxu0 0.0
        %424 = vmatpush1.msra.mxu0 %v354
        %425 = vmatprep.subr.mxu0 0.0
        %426 = vmatpush1.msra.mxu0 %v355
        %427 = vmatprep.subr.mxu0 0.0
        %428 = vmatpush1.msra.mxu0 %v356
        %429 = vmatprep.subr.mxu0 0.0
        %430 = vmatpush1.msra.mxu0 %v357
        %431 = vmatprep.subr.mxu0 0.0
        %432 = vmatpush1.msra.mxu0 %v358
        %433 = vmatprep.subr.mxu0 0.0
        %434 = vmatpush1.msra.mxu0 %v359
        %435 = vmatprep.subr.mxu0 0.0
        %436 = vmatpush1.msra.mxu0 %v360
        %437 = vmatprep.subr.mxu0 0.0
        %438 = vmatpush1.msra.mxu0 %v361
        %439 = vmatprep.subr.mxu0 0.0
        %440 = vmatpush1.msra.mxu0 %v362
        %441 = vmatprep.subr.mxu0 0.0
        %442 = vmatpush1.msra.mxu0 %v363
        %443 = vmatprep.subr.mxu0 0.0
        %444 = vmatpush1.msra.mxu0 %v364
        %445 = vmatprep.subr.mxu0 0.0
        %446 = vmatpush1.msra.mxu0 %v365
        %447 = vmatprep.subr.mxu0 0.0
        %448 = vmatpush1.msra.mxu0 %v366
        %449 = vmatprep.subr.mxu0 0.0
        %450 = vmatpush1.msra.mxu0 %v367
        %451 = vmatprep.subr.mxu0 0.0
        %452 = vmatpush1.msra.mxu0 %v368
        %453 = vmatprep.subr.mxu0 0.0
        %454 = vmatpush1.msra.mxu0 %v369
        %455 = vmatprep.subr.mxu0 0.0
        %456 = vmatpush1.msra.mxu0 %v370
        %457 = vmatprep.subr.mxu0 0.0
        %458 = vmatpush1.msra.mxu0 %v371
        %459 = vmatprep.subr.mxu0 0.0
        %460 = vmatpush1.msra.mxu0 %v372
        %461 = vmatprep.subr.mxu0 0.0
        %462 = vmatpush1.msra.mxu0 %v373
        %463 = vmatprep.subr.mxu0 0.0
        %464 = vmatpush1.msra.mxu0 %v374
        %465 = vmatprep.subr.mxu0 0.0
        %466 = vmatpush1.msra.mxu0 %v375
        %467 = vmatprep.subr.mxu0 0.0
        %468 = vmatpush1.msra.mxu0 %v376
        %469 = vmatprep.subr.mxu0 0.0
        %470 = vmatpush1.msra.mxu0 %v377
        %471 = vmatprep.subr.mxu0 0.0
        %472 = vmatpush1.msra.mxu0 %v378
        %473 = vmatprep.subr.mxu0 0.0
        %474 = vmatpush1.msra.mxu0 %v379
        %475 = vmatprep.subr.mxu0 0.0
        %476 = vmatpush1.msra.mxu0 %v380
        %477 = vmatprep.mubr.f32.mxu0 %v345
        %478 = vmatmul.mubr.f32.gmra.mrb[0].mxu0 %v344
        %v479 = vpop.f32.mrb[0].mxu0
        %v480 = vadd.f32 0.0, %v479
        %v481 = vpop.f32.mrb[0].mxu0
        %482 = vdwg.mxu0
        %483 = vmatprep.subr.mxu0 0.0
        %484 = vmatpush1.msra.mxu0 %v381
        %485 = vmatprep.subr.mxu0 0.0
        %486 = vmatpush1.msra.mxu0 %v382
        %487 = vmatprep.subr.mxu0 0.0
        %488 = vmatpush1.msra.mxu0 %v383
        %489 = vmatprep.subr.mxu0 0.0
        %490 = vmatpush1.msra.mxu0 %v384
        %491 = vmatprep.subr.mxu0 0.0
        %492 = vmatpush1.msra.mxu0 %v385
        %493 = vmatprep.subr.mxu0 0.0
        %494 = vmatpush1.msra.mxu0 %v386
        %495 = vmatprep.subr.mxu0 0.0
        %496 = vmatpush1.msra.mxu0 %v387
        %497 = vmatprep.subr.mxu0 0.0
        %498 = vmatpush1.msra.mxu0 %v388
        %499 = vmatprep.subr.mxu0 0.0
        %500 = vmatpush1.msra.mxu0 %v389
        %501 = vmatprep.subr.mxu0 0.0
        %502 = vmatpush1.msra.mxu0 %v390
        %503 = vmatprep.subr.mxu0 0.0
        %504 = vmatpush1.msra.mxu0 %v391
        %505 = vmatprep.subr.mxu0 0.0
        %506 = vmatpush1.msra.mxu0 %v392
        %507 = vmatprep.subr.mxu0 0.0
        %508 = vmatpush1.msra.mxu0 %v393
        %509 = vmatprep.subr.mxu0 0.0
        %510 = vmatpush1.msra.mxu0 %v394
        %511 = vmatprep.subr.mxu0 0.0
        %512 = vmatpush1.msra.mxu0 %v395
        %513 = vmatprep.subr.mxu0 0.0
        %514 = vmatpush1.msra.mxu0 %v396
        %515 = vmatprep.subr.mxu0 0.0
        %516 = vmatpush1.msra.mxu0 %v397
        %517 = vmatprep.subr.mxu0 0.0
        %518 = vmatpush1.msra.mxu0 %v398
        %519 = vmatprep.subr.mxu0 0.0
        %520 = vmatpush1.msra.mxu0 %v399
        %521 = vmatprep.subr.mxu0 0.0
        %522 = vmatpush1.msra.mxu0 %v400
        %523 = vmatprep.subr.mxu0 0.0
        %524 = vmatpush1.msra.mxu0 %v401
        %525 = vmatprep.subr.mxu0 0.0
        %526 = vmatpush1.msra.mxu0 %v402
        %527 = vmatprep.subr.mxu0 0.0
        %528 = vmatpush1.msra.mxu0 %v403
        %529 = vmatprep.subr.mxu0 0.0
        %530 = vmatpush1.msra.mxu0 %v404
        %531 = vmatprep.subr.mxu0 0.0
        %532 = vmatpush1.msra.mxu0 %v405
        %533 = vmatprep.subr.mxu0 0.0
        %534 = vmatpush1.msra.mxu0 %v406
        %535 = vmatprep.subr.mxu0 0.0
        %536 = vmatpush1.msra.mxu0 %v407
        %537 = vmatprep.subr.mxu0 0.0
        %538 = vmatpush1.msra.mxu0 %v408
        %539 = vmatprep.subr.mxu0 0.0
        %540 = vmatpush1.msra.mxu0 %v409
        %541 = vmatprep.subr.mxu0 0.0
        %542 = vmatpush1.msra.mxu0 %v410
        %543 = vmatprep.subr.mxu0 0.0
        %544 = vmatpush1.msra.mxu0 %v411
        %545 = vmatprep.subr.mxu0 0.0
        %546 = vmatpush1.msra.mxu0 %v412
        %547 = vmatprep.mubr.f32.mxu0 %v347
        %548 = vmatmul.mubr.f32.gmra.mrb[0].mxu0 %v346
        %v549 = vpop.f32.mrb[0].mxu0
        %v550 = vadd.f32 %v480, %v549
        %v551 = vpop.f32.mrb[0].mxu0
        %552 = vdwg.mxu0
        %v553 = vadd.f32 %v348, %v550
        %554 = vst [vmem:[#allocation2] sm:$0xff] %v553
        %p555 = scmp.eq.s32.totalorder %s29, 1
        // Predicated region
        $region53: #{tpu_custom_call.1} parent=35 // pred_check
          %p556 = pneg %p555
        $region54: #{tpu_custom_call.1} parent=35 // pred_check_branch
          %558 = sbr.rel (%p556) target = $region56
        $region55: #{tpu_custom_call.1} parent=35 // pred_region
          %v559 = vld [vmem:[#allocation2] sm:$0xff]
          %v560 = vld [vmem:[%s330] sm:$0x1]
          %v562 = vlaneseq
          %v563 = vshrl.u32 %v562, 7
          %v564 = vsub.s32 0, %v563
          %v565 = vrot.slane %v560, %v564
          %v567 = vadd.f32 %v559, %v565
          %568 = vst [vmem:[#allocation9] sm:$0xff] %v567
        $region56: #{tpu_custom_call.1} parent=35 // pred_fallthru
          _
        // Predicated region
        $region57: #{tpu_custom_call.1} parent=35 // pred_check
          %p569 = pneg %p171
        $region58: #{tpu_custom_call.1} parent=35 // pred_check_branch
          %571 = sbr.rel (%p569) target = $region60
        $region59: #{tpu_custom_call.1} parent=35 // pred_region
          %s573 = ssub.s32 128, 128
          %574 = vsyncadd [#allocation5], %s573
          %s575 = sadd.s32 %s28, %s27
          %s576 = smul.addr %s575, 128
          %s577 = scalar_lea.hbm %s4, %s576
          %s579 = sshll.u32 [#allocation9], 4
          %s580 = int_to_ptr.vmem [resolvable:$true] %s579
          %582 = dma.vmem_to_hbm [thread:$0]  %s580, 128, %s577, [#allocation5]
        $region60: #{tpu_custom_call.1} parent=35 // pred_fallthru
          _
        // Predicated region
        $region61: #{tpu_custom_call.1} parent=35 // pred_check
          %p583 = pneg %p171
        $region62: #{tpu_custom_call.1} parent=35 // pred_check_branch
          %585 = sbr.rel (%p583) target = $region64
        $region63: #{tpu_custom_call.1} parent=35 // pred_region
          %586 = dma.done [#allocation5], 128
        $region64: #{tpu_custom_call.1} parent=35 // pred_fallthru
          _
      $region36: #{tpu_custom_call.1} parent=5 // pred_fallthru
        _
      %p587 = scmp.le.s32.totalorder 2, %s17
      // Predicated region
      $region65: #{tpu_custom_call.1} parent=5 // pred_check
        %p588 = pneg %p587
      $region66: #{tpu_custom_call.1} parent=5 // pred_check_branch
        %590 = sbr.rel (%p588) target = $region68
      $region67: #{tpu_custom_call.1} parent=5 // pred_region
        %s591 = ssub.s32 %s17, 2
      $region68: #{tpu_custom_call.1} parent=5 // pred_fallthru
        _
    $region6: #{tpu_custom_call.1} parent=1 // loop_footer
      %s21 = sadd.s32 1, %s17
    $region7: #{tpu_custom_call.1} parent=1 // loop_footer_branch
      %16 = sbr.rel target = $region3
    $region8: #{tpu_custom_call.1} parent=1 // loop_exit
      _
    %592 = vsyncpa [#allocation4], 1
    %s593 = scalar_lea.sflag [#allocation4], 1
    %594 = vsyncpa %s593, 1
    %595 = vsyncpa [#allocation7], 1
    %s596 = scalar_lea.sflag [#allocation7], 1
    %597 = vsyncpa %s596, 1
    %598 = vsyncpa [#allocation5], 1
    %s599 = scalar_lea.sflag [#allocation5], 1
    %600 = vsyncpa %s599, 1

</llo_original>
